<compile_context>
chip_gen: v5e
topology: v5e:2x2
jax: 0.10.0
libtpu: 0.0.40
codegen_flags: <defaults>
</compile_context>

<pallas_src>
import functools

import jax
import jax.numpy as jnp
import numpy as np
from jax import lax
from jax.experimental import pallas as pl
from jax.experimental.pallas import tpu as pltpu

_LANES = 128
_SUBLANES = 8


def _cdiv(a, b):
    return -(-a // b)


def _round_up(a, b):
    return _cdiv(a, b) * b


def _tversky_kernel(p_ref, g_ref, out_ref, *acc_refs, beta, total_m, total_n,
                    n_chunk, s_tile, needs_col_mask, mask_n_rows):
    """Process one (n_chunk, s_tile, 128) slab of each input.

    grid = (num_s_tiles ["parallel"], num_n_chunks ["arbitrary"]).
    acc_refs is () when a single N pass covers the batch, otherwise three
    (s_tile, 128) fp32 VMEM accumulators (intersection, sum_p, sum_g).
    """
    j = pl.program_id(0)          # S-tile index -> output slot
    k = pl.program_id(1)          # N-chunk index -> reduction step

    p = p_ref[...].astype(jnp.float32)
    g = g_ref[...].astype(jnp.float32)

    if mask_n_rows:
        # Last N-chunk is ragged: zero the garbage batch rows (zeros are
        # neutral for all three sums) -> no HBM-side padding of the batch.
        row_n = lax.broadcasted_iota(jnp.int32, p.shape, 0) + k * n_chunk
        keep = row_n < total_n
        p = jnp.where(keep, p, 0.0)
        g = jnp.where(keep, g, 0.0)

    # Per-chunk reductions over the batch axis (dim=0 in the PyTorch module).
    inter_c = (g * p).sum(axis=0)             # (s_tile, 128)
    sum_p_c = p.sum(axis=0)
    sum_g_c = g.sum(axis=0)

    def write_out(vals):
        rows = vals.shape[0]
        if rows % _SUBLANES == 0:
            out_ref[...] = vals.reshape(
                rows // _SUBLANES, _SUBLANES, _LANES).sum(axis=0)
        else:
            # Tiny-input corner (S < 8): column sums go into sublane 0 of the
            # (8, 128) output block, other sublanes are zero.
            colsum = vals.sum(axis=0, keepdims=True)            # (1, 128)
            rid = lax.broadcasted_iota(jnp.int32, (_SUBLANES, _LANES), 0)
            out_ref[...] = jnp.where(rid == 0, colsum, 0.0)

    def finalize(inter, sum_p, sum_g):
        # den == inter + beta*sum((1-g)p) + (1-beta)*sum(g(1-p))  (exact identity)
        den = beta * sum_p + (1.0 - beta) * sum_g
        # EUP reciprocal seed + two Newton-Raphson refinements: fp32-accurate
        # without a multi-op VPU divide (approx=False would be a VPU divide).
        inv = pl.reciprocal(den, approx=True)
        inv = inv * (2.0 - den * inv)
        inv = inv * (2.0 - den * inv)
        iou = inter * inv     # real all-zero columns stay 0/0 = NaN, like torch

        if needs_col_mask:
            # Only the last S-tile contains padded / out-of-bounds columns;
            # every earlier tile skips the iota/compare/select completely.
            last_j = pl.num_programs(0) - 1

            @pl.when(j != last_j)
            def _():
                write_out(iou)

            @pl.when(j == last_j)
            def _():
                rows, lanes = iou.shape
                r = lax.broadcasted_iota(jnp.int32, (rows, lanes), 0)
                c = lax.broadcasted_iota(jnp.int32, (rows, lanes), 1)
                col = (j * s_tile + r) * _LANES + c
                write_out(jnp.where(col < total_m, iou, 0.0))
        else:
            write_out(iou)

    if not acc_refs:
        # Single pass over the batch: no VMEM scratch round trip at all.
        finalize(inter_c, sum_p_c, sum_g_c)
    else:
        inter_acc, sum_p_acc, sum_g_acc = acc_refs

        @pl.when(k == 0)
        def _():
            inter_acc[...] = inter_c
            sum_p_acc[...] = sum_p_c
            sum_g_acc[...] = sum_g_c

        @pl.when(k > 0)
        def _():
            inter_acc[...] += inter_c
            sum_p_acc[...] += sum_p_c
            sum_g_acc[...] += sum_g_c

        @pl.when(k == pl.num_programs(1) - 1)
        def _():
            finalize(inter_acc[...], sum_p_acc[...], sum_g_acc[...])


def tversky_loss(pixel_probabilities, ground_truth, beta=0.5,
                 block_budget_bytes=None, vmem_limit_bytes=None):
    """Pallas implementation of Tversky.forward (returns a scalar loss)."""
    assert pixel_probabilities.shape == ground_truth.shape
    beta = float(beta)
    n = pixel_probabilities.shape[0]
    m = int(np.prod(pixel_probabilities.shape[1:]))

    itemsize = max(jnp.dtype(pixel_probabilities.dtype).itemsize,
                   jnp.dtype(ground_truth.dtype).itemsize)

    # ---- generation-aware VMEM budget --------------------------------------
    if block_budget_bytes is None or vmem_limit_bytes is None:
        try:
            vmem_cap = int(pltpu.get_tpu_info().vmem_capacity_bytes)
        except Exception:                       # be conservative if query fails
            vmem_cap = 64 * 1024 * 1024         # v7x per-TensorCore VMEM
        if vmem_cap >= 128 * 1024 * 1024:       # v5e / v6e: plenty of VMEM
            default_limit = 96 * 1024 * 1024
            default_budget = 72 * 1024 * 1024   # ~12-16 MiB per input block
        else:                                   # v7x: 64 MiB per TensorCore
            default_limit = 48 * 1024 * 1024
            default_budget = 36 * 1024 * 1024   # ~6-8 MiB per input block
        if vmem_limit_bytes is None:
            vmem_limit_bytes = default_limit
        if block_budget_bytes is None:
            block_budget_bytes = default_budget

    # Bytes per S-row per batch element: 2 inputs x 2 pipeline buffers at the
    # native dtype plus the fp32 temporaries the kernel materializes (cast
    # copies + g*p product; fp32 inputs only need the product).
    n_f32_temps = 1 if itemsize >= 4 else 3
    per_s_per_n = _LANES * (4 * itemsize + n_f32_temps * 4)
    per_s_fixed = 3 * _LANES * 4                # fp32 accumulators

    # ---- batch (N) chunking: resolves the old large-N TODO ------------------
    max_n_chunk = max(1, int(block_budget_bytes // (per_s_per_n * _SUBLANES)))
    n_chunk = min(n, max_n_chunk)
    num_n_chunks = _cdiv(n, n_chunk)
    mask_n_rows = (num_n_chunks * n_chunk != n)

    # ---- column (S) tiling ---------------------------------------------------
    s_total = _cdiv(m, _LANES)
    m128 = s_total * _LANES

    per_s_total = n_chunk * per_s_per_n + per_s_fixed
    s_fit = max(_SUBLANES,
                (int(block_budget_bytes // per_s_total) // _SUBLANES) * _SUBLANES)
    if s_total <= _SUBLANES:
        s_tile = s_total                        # single (possibly <8-row) tile
    else:
        s_tile = min(s_fit, (s_total // _SUBLANES) * _SUBLANES)
    num_s_tiles = _cdiv(s_total, s_tile)
    # v7x megacore: make sure the "parallel" axis has >= 2 blocks when possible.
    if num_s_tiles == 1 and s_tile >= 2 * _SUBLANES:
        s_tile = _round_up(s_tile // 2, _SUBLANES)
        num_s_tiles = _cdiv(s_total, s_tile)

    needs_col_mask = (num_s_tiles * s_tile * _LANES != m)

    # ---- (N, S, 128) layout so every (s_tile, 128) slab is a packed vreg -----
    # Columns are padded only to the next multiple of 128 (and only when
    # needed); ragged trailing S-tiles are masked in-kernel, so the common
    # 128-aligned case streams the inputs with zero extra HBM traffic.
    def prep(x):
        flat = x.reshape(n, m)                  # keep native dtype in HBM
        if m128 != m:
            flat = jnp.pad(flat, ((0, 0), (0, m128 - m)))
        return flat.reshape(n, s_total, _LANES)

    p3 = prep(pixel_probabilities)
    g3 = prep(ground_truth)

    multi_pass = num_n_chunks > 1
    kernel = functools.partial(
        _tversky_kernel, beta=beta, total_m=m, total_n=n, n_chunk=n_chunk,
        s_tile=s_tile, needs_col_mask=needs_col_mask, mask_n_rows=mask_n_rows)

    scratch_shapes = (
        [pltpu.VMEM((s_tile, _LANES), jnp.float32) for _ in range(3)]
        if multi_pass else [])

    partials = pl.pallas_call(
        kernel,
        out_shape=jax.ShapeDtypeStruct((num_s_tiles * _SUBLANES, _LANES),
                                       jnp.float32),
        grid_spec=pltpu.PrefetchScalarGridSpec(
            num_scalar_prefetch=0,
            grid=(num_s_tiles, num_n_chunks),
            in_specs=[
                pl.BlockSpec((n_chunk, s_tile, _LANES), lambda j, k: (k, j, 0)),
                pl.BlockSpec((n_chunk, s_tile, _LANES), lambda j, k: (k, j, 0)),
            ],
            out_specs=pl.BlockSpec((_SUBLANES, _LANES), lambda j, k: (j, 0)),
            scratch_shapes=scratch_shapes,
        ),
        compiler_params=pltpu.CompilerParams(
            dimension_semantics=("parallel", "arbitrary"),
            vmem_limit_bytes=int(vmem_limit_bytes),
        ),
    )(p3, g3)

    # Tiny finalize outside the kernel: mean over the original M columns.
    return jnp.float32(1.0) - jnp.sum(partials) / jnp.float32(m)


def _tversky_ref(p, g, beta=0.5):
    # Pure-JAX reference matching the PyTorch module exactly.
    n = p.shape[0]
    p = p.astype(jnp.float32).reshape(n, -1)
    g = g.astype(jnp.float32).reshape(n, -1)
    intersection = (g * p).sum(axis=0)
    fp = beta * ((1.0 - g) * p).sum(axis=0)
    fn = (1.0 - beta) * (g * (1.0 - p)).sum(axis=0)
    tiou = intersection / (intersection + fp + fn)
    return 1.0 - tiou.mean()


if __name__ == "__main__":
    root = jax.random.PRNGKey(0)

    def check(shape, salt, beta=0.5, **kwargs):
        k1, k2 = jax.random.split(jax.random.fold_in(root, salt))
        p = jax.random.uniform(k1, shape, dtype=jnp.float32)
        g = (jax.random.uniform(k2, shape, dtype=jnp.float32) > 0.5).astype(
            jnp.float32)
        loss = jax.block_until_ready(tversky_loss(p, g, beta=beta, **kwargs))
        ref = _tversky_ref(p, g, beta=beta)
        np.testing.assert_allclose(np.asarray(loss), np.asarray(ref),
                                   rtol=1e-5, atol=1e-6)

    # Primary case from the module spec (NCHW, M 128-aligned, single pass).
    check((2, 4, 16, 16), salt=0)
    # Non-128-aligned M: exercises the 128-pad, tiny S-tile and tail mask.
    check((3, 3, 7, 7), salt=1)
    # Tiny forced VMEM budget: exercises N-chunked accumulation with a ragged
    # last N-chunk, multiple S-tiles with a ragged trailing tile, and the
    # pl.when-gated scratch finalize.
    check((5, 4, 16, 24), salt=2, block_budget_bytes=48 * 1024)

    print("KERNEL_OK")
</pallas_src>

<mosaic_0001>
module attributes {stable_mosaic.version = 11 : i64} {
  func.func @_tversky_kernel(%arg0: i32, %arg1: i32, %arg2: memref<2x8x128xf32, #tpu.memory_space<vmem>>, %arg3: memref<2x8x128xf32, #tpu.memory_space<vmem>>, %arg4: memref<8x128xf32, #tpu.memory_space<vmem>>) attributes {dimension_semantics = [#tpu.dimension_semantics<parallel>, #tpu.dimension_semantics<arbitrary>], iteration_bounds = array<i64: 1, 1>, scalar_prefetch = 0 : i64, scratch_operands = 0 : i64, tpu.core_type = #tpu.core_type<tc>, window_params = [{transform_indices = @transform_0, window_bounds = array<i64: 2, 8, 128>}, {transform_indices = @transform_1, window_bounds = array<i64: 2, 8, 128>}, {transform_indices = @transform_2, window_bounds = array<i64: 8, 128>}]} {
    %c0 = arith.constant 0 : index
    %c0_0 = arith.constant 0 : index
    %c0_1 = arith.constant 0 : index
    %0 = vector.load %arg2[%c0, %c0_0, %c0_1] : memref<2x8x128xf32, #tpu.memory_space<vmem>>, vector<2x8x128xf32>
    %c0_2 = arith.constant 0 : index
    %c0_3 = arith.constant 0 : index
    %c0_4 = arith.constant 0 : index
    %1 = vector.load %arg3[%c0_2, %c0_3, %c0_4] : memref<2x8x128xf32, #tpu.memory_space<vmem>>, vector<2x8x128xf32>
    %2 = arith.mulf %1, %0 : vector<2x8x128xf32>
    %cst = arith.constant dense<0.000000e+00> : vector<8x128xf32>
    %3 = vector.multi_reduction <add>, %2, %cst [0] : vector<2x8x128xf32> to vector<8x128xf32>
    %cst_5 = arith.constant dense<0.000000e+00> : vector<8x128xf32>
    %4 = vector.multi_reduction <add>, %0, %cst_5 [0] : vector<2x8x128xf32> to vector<8x128xf32>
    %cst_6 = arith.constant dense<0.000000e+00> : vector<8x128xf32>
    %5 = vector.multi_reduction <add>, %1, %cst_6 [0] : vector<2x8x128xf32> to vector<8x128xf32>
    %cst_7 = arith.constant 5.000000e-01 : f32
    %6 = vector.broadcast %cst_7 : f32 to vector<8x128xf32>
    %7 = arith.mulf %6, %4 : vector<8x128xf32>
    %cst_8 = arith.constant 5.000000e-01 : f32
    %8 = vector.broadcast %cst_8 : f32 to vector<8x128xf32>
    %9 = arith.mulf %8, %5 : vector<8x128xf32>
    %10 = arith.addf %7, %9 : vector<8x128xf32>
    %11 = tpu.reciprocal %10 {approx = true} : vector<8x128xf32> -> vector<8x128xf32>
    %12 = arith.mulf %10, %11 : vector<8x128xf32>
    %cst_9 = arith.constant 2.000000e+00 : f32
    %13 = vector.broadcast %cst_9 : f32 to vector<8x128xf32>
    %14 = arith.subf %13, %12 : vector<8x128xf32>
    %15 = arith.mulf %11, %14 : vector<8x128xf32>
    %16 = arith.mulf %10, %15 : vector<8x128xf32>
    %cst_10 = arith.constant 2.000000e+00 : f32
    %17 = vector.broadcast %cst_10 : f32 to vector<8x128xf32>
    %18 = arith.subf %17, %16 : vector<8x128xf32>
    %19 = arith.mulf %15, %18 : vector<8x128xf32>
    %20 = arith.mulf %3, %19 : vector<8x128xf32>
    %21 = vector.shape_cast %20 : vector<8x128xf32> to vector<1x8x128xf32>
    %cst_11 = arith.constant dense<0.000000e+00> : vector<8x128xf32>
    %22 = vector.multi_reduction <add>, %21, %cst_11 [0] : vector<1x8x128xf32> to vector<8x128xf32>
    %c0_12 = arith.constant 0 : index
    %c0_13 = arith.constant 0 : index
    %23 = vector.load %arg4[%c0_12, %c0_13] : memref<8x128xf32, #tpu.memory_space<vmem>>, vector<8x128xf32>
    tpu.vector_store %arg4[%c0_12, %c0_13], %22 {strides = array<i32>} : memref<8x128xf32, #tpu.memory_space<vmem>>, vector<8x128xf32>,
    return
  }
  func.func @transform_0(%arg0: i32, %arg1: i32) -> (i32, i32, i32) {
    %c0_i32 = arith.constant 0 : i32
    %c0_i32_0 = arith.constant 0 : i32
    return %arg1, %arg0, %c0_i32 : i32, i32, i32
  }
  func.func @transform_1(%arg0: i32, %arg1: i32) -> (i32, i32, i32) {
    %c0_i32 = arith.constant 0 : i32
    %c0_i32_0 = arith.constant 0 : i32
    return %arg1, %arg0, %c0_i32 : i32, i32, i32
  }
  func.func @transform_2(%arg0: i32, %arg1: i32) -> (i32, i32) {
    %c0_i32 = arith.constant 0 : i32
    %c0_i32_0 = arith.constant 0 : i32
    return %arg0, %c0_i32 : i32, i32
  }
}

</mosaic_0001>

<llo_original>
// kernel: tpu_custom_call.1
$region0: #{tpu_custom_call.1}
  #allocation0 [shape = 'u32[]', space=smem, size = 0x4, offset = 0x4, fixed_abs, tag = 'smem constant byte address 0x4 - core index']
  #allocation1 [shape = 'u32[72,128]{1,0:T(1,128)}', space=vmem, size = 0x9000, scoped, tag = 'internal scratch']
  %s0 = inlined_call_operand.hbm [shape: f32[2,8,128], index: 0, kind: input, shape index: {}]
  %s1 = inlined_call_operand.hbm [shape: f32[2,8,128], index: 1, kind: input, shape index: {}]
  %s2 = inlined_call_operand.hbm [shape: f32[8,128], index: 2, kind: output, shape index: {}]
  %s3 = sld [smem:[#allocation0]]
  $region26: #{tpu_custom_call.1} parent=0
    _
  %s5 = ssub.s32 1, %s3
  %s6 = scalar_select 0, %s5, %s3
  $region1: #{tpu_custom_call.1} parent=0
    #allocation2 [shape = 'u8[8192]{0}', space=vmem, size = 0x2000, scoped, tag = 'input window, operand 0, single buffered']
    #allocation3 [shape = 's32[1]{0}', space=sflag, size = 0x4, scoped, tag = 'scoped memory for tpu_custom_call.1']
    #allocation4 [shape = 's32[1]{0}', space=sflag, size = 0x4, scoped, tag = 'scoped memory for tpu_custom_call.1']
    #allocation5 [shape = 'u8[8192]{0}', space=vmem, size = 0x2000, scoped, tag = 'input window, operand 1, single buffered']
    #allocation6 [shape = 's32[1]{0}', space=sflag, size = 0x4, scoped, tag = 'scoped memory for tpu_custom_call.1']
    #allocation7 [shape = 'u8[4096]{0}', space=vmem, size = 0x1000, scoped, tag = 'output window, operand 0, single buffered']
    %7 = vsyncpa [#allocation3], 0
    %8 = vsyncpa [#allocation6], 0
    %9 = vsyncpa [#allocation4], 0
    // Predicated region
    $region2: #{tpu_custom_call.1} parent=1 // pred_check
      _
    $region3: #{tpu_custom_call.1} parent=1 // pred_check_branch
      %11 = sbr.rel (0) target = $region5
    $region4: #{tpu_custom_call.1} parent=1 // pred_region
      %13 = vsyncadd [#allocation3], 0
      %s14 = sshll.u32 %s0, 4
      %s15 = int_to_ptr.hbm [resolvable:$true] %s14
      %s16 = sshll.u32 [#allocation2], 4
      %s17 = int_to_ptr.vmem [resolvable:$true] %s16
      %22 = dma.hbm_to_vmem [thread:$0]  %s15, 256, %s17, [#allocation3], 128, 128, 8
    $region5: #{tpu_custom_call.1} parent=1 // pred_fallthru
      _
    // Predicated region
    $region6: #{tpu_custom_call.1} parent=1 // pred_check
      _
    $region7: #{tpu_custom_call.1} parent=1 // pred_check_branch
      %24 = sbr.rel (0) target = $region9
    $region8: #{tpu_custom_call.1} parent=1 // pred_region
      %26 = vsyncadd [#allocation6], 0
      %s27 = sshll.u32 %s1, 4
      %s28 = int_to_ptr.hbm [resolvable:$true] %s27
      %s29 = sshll.u32 [#allocation5], 4
      %s30 = int_to_ptr.vmem [resolvable:$true] %s29
      %35 = dma.hbm_to_vmem [thread:$0]  %s28, 256, %s30, [#allocation6], 128, 128, 8
    $region9: #{tpu_custom_call.1} parent=1 // pred_fallthru
      _
    // Predicated region
    $region10: #{tpu_custom_call.1} parent=1 // pred_check
      _
    $region11: #{tpu_custom_call.1} parent=1 // pred_check_branch
      %37 = sbr.rel (0) target = $region13
    $region12: #{tpu_custom_call.1} parent=1 // pred_region
      %39 = dma.done [#allocation3], 256
    $region13: #{tpu_custom_call.1} parent=1 // pred_fallthru
      _
    // Predicated region
    $region14: #{tpu_custom_call.1} parent=1 // pred_check
      _
    $region15: #{tpu_custom_call.1} parent=1 // pred_check_branch
      %41 = sbr.rel (0) target = $region17
    $region16: #{tpu_custom_call.1} parent=1 // pred_region
      %43 = dma.done [#allocation6], 256
    $region17: #{tpu_custom_call.1} parent=1 // pred_fallthru
      _
    %v44 = vld [vmem:[#allocation2] sm:$0xff]
    %v45 = vld [vmem:[#allocation2 + $0x8] sm:$0xff]
    %v46 = vld [vmem:[#allocation5] sm:$0xff]
    %v47 = vld [vmem:[#allocation5 + $0x8] sm:$0xff]
    %v48 = vmul.f32 %v46, %v44
    %v49 = vmul.f32 %v47, %v45
    %v50 = vadd.f32 %v48, %v49
    %v51 = vadd.f32 %v44, %v45
    %v52 = vadd.f32 %v46, %v47
    %v53 = vmul.f32 %v51, 0.5
    %v54 = vmul.f32 %v52, 0.5
    %v55 = vadd.f32 %v53, %v54
    %v56 = vrcp.pop %v55
    %v57 = vmul.f32 %v55, %v56
    %v58 = vsub.f32 2.0, %v57
    %v59 = vmul.f32 %v56, %v58
    %v60 = vmul.f32 %v55, %v59
    %v61 = vsub.f32 2.0, %v60
    %v62 = vmul.f32 %v59, %v61
    %v63 = vmul.f32 %v50, %v62
    %v64 = vadd.f32 %v63, 0.0
    %65 = vst [vmem:[#allocation7] sm:$0xff] %v64
    // Predicated region
    $region18: #{tpu_custom_call.1} parent=1 // pred_check
      _
    $region19: #{tpu_custom_call.1} parent=1 // pred_check_branch
      %67 = sbr.rel (0) target = $region21
    $region20: #{tpu_custom_call.1} parent=1 // pred_region
      %69 = vsyncadd [#allocation4], 0
      %s71 = sshll.u32 [#allocation7], 4
      %s72 = int_to_ptr.vmem [resolvable:$true] %s71
      %s73 = sshll.u32 %s2, 4
      %s74 = int_to_ptr.hbm [resolvable:$true] %s73
      %76 = dma.vmem_to_hbm [thread:$0]  %s72, 128, %s74, [#allocation4]
    $region21: #{tpu_custom_call.1} parent=1 // pred_fallthru
      _
    // Predicated region
    $region22: #{tpu_custom_call.1} parent=1 // pred_check
      _
    $region23: #{tpu_custom_call.1} parent=1 // pred_check_branch
      %78 = sbr.rel (0) target = $region25
    $region24: #{tpu_custom_call.1} parent=1 // pred_region
      %80 = dma.done [#allocation4], 128
    $region25: #{tpu_custom_call.1} parent=1 // pred_fallthru
      _
    %81 = vsyncpa [#allocation3], 1
    %82 = vsyncpa [#allocation6], 1
    %83 = vsyncpa [#allocation4], 1

</llo_original>
